<compile_context>
chip_gen: v7x
topology: tpu7x:2x2x1
jax: 0.10.0
libtpu: 0.0.40
codegen_flags: <defaults>
</compile_context>

<pallas_src>
import math

import jax
import jax.numpy as jnp
import numpy as np
from jax.experimental import pallas as pl
from jax.experimental.pallas import tpu as pltpu

_LANES = 128
_GOLDEN_I32 = np.int32(-1640531527)   # 0x9E3779B9 as two's-complement int32
_HASH_M1 = np.uint32(0x7FEB352D)      # lowbias32 multipliers (C. Wellons)
_HASH_M2 = np.uint32(0x846CA68B)


def _uniform_kernel(seed_ref, param_ref, out_ref):
    block_rows, lanes = out_ref.shape

    # Unique int32 counter per output element across the whole grid: only the
    # row offset depends on program_id, so every block draws from a disjoint
    # part of the stream and the grid axis can safely be "parallel".
    row0 = pl.program_id(0) * block_rows
    r = jax.lax.broadcasted_iota(jnp.int32, (block_rows, lanes), 0) + row0
    c = jax.lax.broadcasted_iota(jnp.int32, (block_rows, lanes), 1)
    state = r * lanes + c + seed_ref[0] * _GOLDEN_I32        # wraps mod 2^32

    # Counter-based PRNG: two rounds of the lowbias32 finalizer (VPU bit ops
    # only -> portable across Mosaic and interpret mode).
    x = state.astype(jnp.uint32)
    for _ in range(2):
        x = x ^ (x >> 16)
        x = x * _HASH_M1
        x = x ^ (x >> 15)
        x = x * _HASH_M2
        x = x ^ (x >> 16)

    # Top 24 bits -> f32 uniform in [0, 1), then a single fused affine map into
    # [floor, 1 - floor) using kernel-invariant scalars from SMEM.
    u01 = (x >> 8).astype(jnp.int32).astype(jnp.float32) * jnp.float32(1.0 / (1 << 24))
    offset = param_ref[0]   # floor
    scale = param_ref[1]    # 1 - 2 * floor
    hi = param_ref[2]       # nextafter(1 - floor, 0): strict upper bound
    out_ref[...] = jnp.minimum(offset + u01 * scale, hi)


def _choose_layout(total):
    """Return (rows, tile_rows, padded) for a lane-dense (rows, 128) f32 slab."""
    lanes = _LANES
    rows_exact = total // lanes if (total > 0 and total % lanes == 0) else 0
    if rows_exact > 0 and (rows_exact % 8 == 0 or rows_exact <= 2048):
        rows, padded = rows_exact, False          # exact: wrapper reshape is free
    else:
        rows, padded = max(8, 8 * math.ceil(total / (lanes * 8))), True

    if rows % 8 == 0:
        tile = 8
        for cand in (512, 256, 128, 64, 32, 16):  # 512x128xf32 = 256 KiB per tile
            if cand <= rows and rows % cand == 0:
                tile = cand
                break
    else:
        tile = rows  # single block equal to the full extent (only when rows <= 2048)
    return rows, tile, padded


def uniform_sample(size, floor=1e-5, seed=0):
    """Pallas equivalent of UniformSampler().forward(size, floor)."""
    size = tuple(int(s) for s in size)
    total = int(np.prod(size, dtype=np.int64)) if len(size) > 0 else 1
    rows, tile, padded = _choose_layout(total)

    floor_f = np.float32(floor)
    scale_f = np.float32(1.0) - np.float32(2.0) * floor_f
    hi_f = np.nextafter(np.float32(1.0) - floor_f, np.float32(0.0))
    params = jnp.asarray([floor_f, scale_f, hi_f], dtype=jnp.float32)
    seed_arr = jnp.asarray([seed], dtype=jnp.int32)

    slab = pl.pallas_call(
        _uniform_kernel,
        out_shape=jax.ShapeDtypeStruct((rows, _LANES), jnp.float32),
        grid=(rows // tile,),
        in_specs=[
            pl.BlockSpec(memory_space=pltpu.MemorySpace.SMEM),  # seed (1,) int32
            pl.BlockSpec(memory_space=pltpu.MemorySpace.SMEM),  # [floor, scale, hi]
        ],
        out_specs=pl.BlockSpec((tile, _LANES), lambda i: (i, 0)),
        compiler_params=pltpu.CompilerParams(
            dimension_semantics=("parallel",),
        ),
    )(seed_arr, params)

    flat = slab.reshape(-1)
    if padded:
        flat = flat[:total]
    return flat.reshape(size)


if __name__ == "__main__":
    # The module takes only a shape + floor; derive a deterministic seed from PRNGKey(0).
    key = jax.random.PRNGKey(0)
    seed = int(jax.random.randint(key, (), 0, 2**31 - 1, dtype=jnp.int32))

    size = (2, 4, 16, 16)
    floor = 1e-5

    out = uniform_sample(size, floor=floor, seed=seed)
    out = jax.block_until_ready(out)

    assert out.shape == size, out.shape
    assert out.dtype == jnp.float32, out.dtype
    o = np.asarray(out)
    assert np.all(o >= np.float32(floor)), o.min()
    assert np.all(o < np.float32(1.0) - np.float32(floor)), o.max()
    assert 0.4 < float(o.mean()) < 0.6, o.mean()          # roughly uniform
    assert np.unique(o).size > o.size // 2                # not degenerate/repeated blocks

    # Also exercise the padded (non-128-aligned) path.
    out2 = jax.block_until_ready(uniform_sample((3, 5, 7), floor=floor, seed=seed + 1))
    assert out2.shape == (3, 5, 7), out2.shape
    o2 = np.asarray(out2)
    assert np.all(o2 >= np.float32(floor)) and np.all(o2 < np.float32(1.0) - np.float32(floor))

    print("KERNEL_OK")
</pallas_src>

<mosaic_0001>
module attributes {stable_mosaic.version = 11 : i64} {
  func.func @_uniform_kernel(%arg0: i32, %arg1: memref<1xi32, #tpu.memory_space<smem>>, %arg2: memref<3xf32, #tpu.memory_space<smem>>, %arg3: memref<16x128xf32, #tpu.memory_space<vmem>>) attributes {dimension_semantics = [#tpu.dimension_semantics<parallel>], iteration_bounds = array<i64: 1>, scalar_prefetch = 0 : i64, scratch_operands = 0 : i64, tpu.core_type = #tpu.core_type<tc>, window_params = [{transform_indices = @transform_0, window_bounds = array<i64: 1>}, {transform_indices = @transform_1, window_bounds = array<i64: 3>}, {transform_indices = @transform_2, window_bounds = array<i64: 16, 128>}]} {
    %c16_i32 = arith.constant 16 : i32
    %0 = arith.muli %arg0, %c16_i32 : i32
    %1 = tpu.iota {dimensions = array<i32: 0>} : vector<16x128xi32>
    %2 = vector.broadcast %0 : i32 to vector<16x128xi32>
    %3 = arith.addi %1, %2 : vector<16x128xi32>
    %4 = tpu.iota {dimensions = array<i32: 1>} : vector<16x128xi32>
    %c128_i32 = arith.constant 128 : i32
    %5 = vector.broadcast %c128_i32 : i32 to vector<16x128xi32>
    %6 = arith.muli %3, %5 : vector<16x128xi32>
    %7 = arith.addi %6, %4 : vector<16x128xi32>
    %c0 = arith.constant 0 : index
    %8 = memref.load %arg1[%c0] : memref<1xi32, #tpu.memory_space<smem>>
    %c-1640531527_i32 = arith.constant -1640531527 : i32
    %9 = arith.muli %8, %c-1640531527_i32 : i32
    %10 = vector.broadcast %9 : i32 to vector<16x128xi32>
    %11 = arith.addi %7, %10 : vector<16x128xi32>
    %c16_i32_0 = arith.constant 16 : i32
    %12 = vector.broadcast %c16_i32_0 : i32 to vector<16x128xi32>
    %13 = arith.shrui %11, %12 : vector<16x128xi32>
    %14 = arith.xori %11, %13 : vector<16x128xi32>
    %c2146121005_i32 = arith.constant 2146121005 : i32
    %15 = vector.broadcast %c2146121005_i32 : i32 to vector<16x128xi32>
    %16 = arith.muli %14, %15 : vector<16x128xi32>
    %c15_i32 = arith.constant 15 : i32
    %17 = vector.broadcast %c15_i32 : i32 to vector<16x128xi32>
    %18 = arith.shrui %16, %17 : vector<16x128xi32>
    %19 = arith.xori %16, %18 : vector<16x128xi32>
    %c-2073254261_i32 = arith.constant -2073254261 : i32
    %20 = vector.broadcast %c-2073254261_i32 : i32 to vector<16x128xi32>
    %21 = arith.muli %19, %20 : vector<16x128xi32>
    %c16_i32_1 = arith.constant 16 : i32
    %22 = vector.broadcast %c16_i32_1 : i32 to vector<16x128xi32>
    %23 = arith.shrui %21, %22 : vector<16x128xi32>
    %24 = arith.xori %21, %23 : vector<16x128xi32>
    %c16_i32_2 = arith.constant 16 : i32
    %25 = vector.broadcast %c16_i32_2 : i32 to vector<16x128xi32>
    %26 = arith.shrui %24, %25 : vector<16x128xi32>
    %27 = arith.xori %24, %26 : vector<16x128xi32>
    %c2146121005_i32_3 = arith.constant 2146121005 : i32
    %28 = vector.broadcast %c2146121005_i32_3 : i32 to vector<16x128xi32>
    %29 = arith.muli %27, %28 : vector<16x128xi32>
    %c15_i32_4 = arith.constant 15 : i32
    %30 = vector.broadcast %c15_i32_4 : i32 to vector<16x128xi32>
    %31 = arith.shrui %29, %30 : vector<16x128xi32>
    %32 = arith.xori %29, %31 : vector<16x128xi32>
    %c-2073254261_i32_5 = arith.constant -2073254261 : i32
    %33 = vector.broadcast %c-2073254261_i32_5 : i32 to vector<16x128xi32>
    %34 = arith.muli %32, %33 : vector<16x128xi32>
    %c16_i32_6 = arith.constant 16 : i32
    %35 = vector.broadcast %c16_i32_6 : i32 to vector<16x128xi32>
    %36 = arith.shrui %34, %35 : vector<16x128xi32>
    %37 = arith.xori %34, %36 : vector<16x128xi32>
    %c8_i32 = arith.constant 8 : i32
    %38 = vector.broadcast %c8_i32 : i32 to vector<16x128xi32>
    %39 = arith.shrui %37, %38 : vector<16x128xi32>
    %40 = arith.sitofp %39 : vector<16x128xi32> to vector<16x128xf32>
    %cst = arith.constant 5.96046448E-8 : f32
    %41 = vector.broadcast %cst : f32 to vector<16x128xf32>
    %42 = arith.mulf %40, %41 : vector<16x128xf32>
    %c0_7 = arith.constant 0 : index
    %43 = memref.load %arg2[%c0_7] : memref<3xf32, #tpu.memory_space<smem>>
    %c1 = arith.constant 1 : index
    %44 = memref.load %arg2[%c1] : memref<3xf32, #tpu.memory_space<smem>>
    %c2 = arith.constant 2 : index
    %45 = memref.load %arg2[%c2] : memref<3xf32, #tpu.memory_space<smem>>
    %46 = vector.broadcast %44 : f32 to vector<16x128xf32>
    %47 = arith.mulf %42, %46 : vector<16x128xf32>
    %48 = vector.broadcast %43 : f32 to vector<16x128xf32>
    %49 = arith.addf %48, %47 : vector<16x128xf32>
    %50 = vector.broadcast %45 : f32 to vector<16x128xf32>
    %51 = arith.minimumf %49, %50 : vector<16x128xf32>
    %c0_8 = arith.constant 0 : index
    %c0_9 = arith.constant 0 : index
    %52 = vector.load %arg3[%c0_8, %c0_9] : memref<16x128xf32, #tpu.memory_space<vmem>>, vector<16x128xf32>
    tpu.vector_store %arg3[%c0_8, %c0_9], %51 {strides = array<i32>} : memref<16x128xf32, #tpu.memory_space<vmem>>, vector<16x128xf32>,
    return
  }
  func.func @transform_0(%arg0: i32) -> i32 {
    %c0_i32 = arith.constant 0 : i32
    %c0_i32_0 = arith.constant 0 : i32
    return %c0_i32 : i32
  }
  func.func @transform_1(%arg0: i32) -> i32 {
    %c0_i32 = arith.constant 0 : i32
    %c0_i32_0 = arith.constant 0 : i32
    return %c0_i32 : i32
  }
  func.func @transform_2(%arg0: i32) -> (i32, i32) {
    %c0_i32 = arith.constant 0 : i32
    %c0_i32_0 = arith.constant 0 : i32
    return %arg0, %c0_i32 : i32, i32
  }
}

</mosaic_0001>

<llo_original>
// kernel: tpu_custom_call.1
$region0: #{tpu_custom_call.1}
  #allocation0 [shape = 'u32[]', space=smem, size = 0x4, offset = 0x4, fixed_abs, tag = 'smem constant byte address 0x4 - core index']
  #allocation1 [shape = 'u32[144,128]{1,0:T(1,128)}', space=vmem, size = 0x12000, scoped, tag = 'internal scratch']
  #allocation2 [shape = 's32[1]{0:T(128)S(6)}', space=smem, size = 0x200, scoped, tag = 'scoped memory for tpu_custom_call.1']
  %s0 = inlined_call_operand.<no memory space> [shape: s32[1], index: 0, kind: input, shape index: {}]
  %s1 = inlined_call_operand.vmem [shape: f32[3], index: 1, kind: input, shape index: {}]
  %s2 = inlined_call_operand.hbm [shape: f32[16,128], index: 2, kind: output, shape index: {}]
  %s3 = sld [smem:[#allocation0]]
  $region22: #{tpu_custom_call.1} parent=0
    _
  %s5 = ssub.s32 1, %s3
  %s6 = scalar_select 0, %s5, %s3
  %7 = sst [smem:[#allocation2]] %s0
  $region1: #{tpu_custom_call.1} parent=0
    #allocation3 [shape = 'u8[512]{0}', space=smem, size = 0x200, scoped, tag = 'input window, operand 1, single buffered']
    #allocation4 [shape = 's32[1]{0}', space=sflag, size = 0x4, scoped, tag = 'scoped memory for tpu_custom_call.1']
    #allocation5 [shape = 's32[1]{0}', space=sflag, size = 0x4, scoped, tag = 'scoped memory for tpu_custom_call.1']
    #allocation6 [shape = 'u8[8192]{0}', space=vmem, size = 0x2000, scoped, tag = 'output window, operand 0, single buffered']
    %8 = vsyncpa [#allocation5], 0
    %9 = vsyncpa [#allocation4], 0
    // Predicated region
    $region2: #{tpu_custom_call.1} parent=1 // pred_check
      _
    $region3: #{tpu_custom_call.1} parent=1 // pred_check_branch
      %11 = sbr.rel (0) target = $region5
    $region4: #{tpu_custom_call.1} parent=1 // pred_region
      _
    $region5: #{tpu_custom_call.1} parent=1 // pred_fallthru
      _
    // Predicated region
    $region6: #{tpu_custom_call.1} parent=1 // pred_check
      _
    $region7: #{tpu_custom_call.1} parent=1 // pred_check_branch
      %13 = sbr.rel (0) target = $region9
    $region8: #{tpu_custom_call.1} parent=1 // pred_region
      %s15 = ssub.s32 16, 16
      %16 = vsyncadd [#allocation5], %s15
      %s18 = sshll.u32 %s1, 4
      %s19 = int_to_ptr.vmem [resolvable:$true] %s18
      %21 = dma.vmem_to_smem %s19, 16, [#allocation3], [#allocation5]
    $region9: #{tpu_custom_call.1} parent=1 // pred_fallthru
      _
    // Predicated region
    $region10: #{tpu_custom_call.1} parent=1 // pred_check
      _
    $region11: #{tpu_custom_call.1} parent=1 // pred_check_branch
      %23 = sbr.rel (0) target = $region13
    $region12: #{tpu_custom_call.1} parent=1 // pred_region
      %24 = dma.done [#allocation5], 16
    $region13: #{tpu_custom_call.1} parent=1 // pred_fallthru
      _
    %25 = sfence
    %s26 = smul.u32 0, 16
    %v27 = vlaneseq
    %v28 = vshrl.u32 %v27, 7
    %v29 = vadd.s32 %v28, 8
    %v30 = vstv %s26
    %v31 = vadd.s32 %v28, %v30
    %v32 = vadd.s32 %v29, %v30
    %v33 = vlaneseq
    %v34 = vand.u32 %v33, 127
    %v35 = vmul.u32 %v31, 128
    %v36 = vmul.u32 %v32, 128
    %v37 = vadd.s32 %v35, %v34
    %v38 = vadd.s32 %v36, %v34
    %s39 = sld [smem:[#allocation2]]
    %s40 = smul.u32 %s39, 2654435769
    %v41 = vstv %s40
    %v42 = vadd.s32 %v37, %v41
    %v43 = vadd.s32 %v38, %v41
    %v44 = vshrl.u32 %v42, 16
    %v45 = vshrl.u32 %v43, 16
    %v46 = vxor.u32 %v42, %v44
    %v47 = vxor.u32 %v43, %v45
    %v48 = vmul.u32 %v46, 2146121005
    %v49 = vmul.u32 %v47, 2146121005
    %v50 = vshrl.u32 %v48, 15
    %v51 = vshrl.u32 %v49, 15
    %v52 = vxor.u32 %v48, %v50
    %v53 = vxor.u32 %v49, %v51
    %v54 = vmul.u32 %v52, 2221713035
    %v55 = vmul.u32 %v53, 2221713035
    %v56 = vshrl.u32 %v54, 16
    %v57 = vshrl.u32 %v55, 16
    %v58 = vxor.u32 %v54, %v56
    %v59 = vxor.u32 %v55, %v57
    %v60 = vshrl.u32 %v58, 16
    %v61 = vshrl.u32 %v59, 16
    %v62 = vxor.u32 %v58, %v60
    %v63 = vxor.u32 %v59, %v61
    %v64 = vmul.u32 %v62, 2146121005
    %v65 = vmul.u32 %v63, 2146121005
    %v66 = vshrl.u32 %v64, 15
    %v67 = vshrl.u32 %v65, 15
    %v68 = vxor.u32 %v64, %v66
    %v69 = vxor.u32 %v65, %v67
    %v70 = vmul.u32 %v68, 2221713035
    %v71 = vmul.u32 %v69, 2221713035
    %v72 = vshrl.u32 %v70, 16
    %v73 = vshrl.u32 %v71, 16
    %v74 = vxor.u32 %v70, %v72
    %v75 = vxor.u32 %v71, %v73
    %v76 = vshrl.u32 %v74, 8
    %v77 = vshrl.u32 %v75, 8
    %v78 = vcvt.s32.f32 %v76
    %v79 = vcvt.s32.f32 %v77
    %v80 = vmul.f32 %v78, 5.9604645e-08
    %v81 = vmul.f32 %v79, 5.9604645e-08
    %s82 = sld [smem:[#allocation3]]
    %s83 = sld [smem:[#allocation3 + $0x1]]
    %s84 = sld [smem:[#allocation3 + $0x2]]
    %v85 = vstv %s83
    %v86 = vmul.f32 %v80, %v85
    %v87 = vmul.f32 %v81, %v85
    %v88 = vstv %s82
    %v89 = vadd.f32 %v88, %v86
    %v90 = vadd.f32 %v88, %v87
    %v91 = vstv %s84
    %v92 = vmin.f32 %v89, %v91
    %v93 = vmin.f32 %v90, %v91
    %94 = vst [vmem:[#allocation6] sm:$0xff] %v92
    %95 = vst [vmem:[#allocation6 + $0x8] sm:$0xff] %v93
    // Predicated region
    $region14: #{tpu_custom_call.1} parent=1 // pred_check
      _
    $region15: #{tpu_custom_call.1} parent=1 // pred_check_branch
      %97 = sbr.rel (0) target = $region17
    $region16: #{tpu_custom_call.1} parent=1 // pred_region
      %s99 = ssub.s32 256, 256
      %100 = vsyncadd [#allocation4], %s99
      %s101 = sshll.u32 [#allocation6], 4
      %s102 = int_to_ptr.vmem [resolvable:$true] %s101
      %107 = dma.vmem_to_hbm [thread:$0]  %s102, 256, %s2, [#allocation4], 128, 128, 8
    $region17: #{tpu_custom_call.1} parent=1 // pred_fallthru
      _
    // Predicated region
    $region18: #{tpu_custom_call.1} parent=1 // pred_check
      _
    $region19: #{tpu_custom_call.1} parent=1 // pred_check_branch
      %109 = sbr.rel (0) target = $region21
    $region20: #{tpu_custom_call.1} parent=1 // pred_region
      %110 = dma.done [#allocation4], 256
    $region21: #{tpu_custom_call.1} parent=1 // pred_fallthru
      _
    %111 = vsyncpa [#allocation4], 1
    %112 = vsyncpa [#allocation5], 1

</llo_original>
